<compile_context>
chip_gen: v7x
topology: tpu7x:2x2x1
jax: 0.10.0
libtpu: 0.0.40
codegen_flags: <defaults>
</compile_context>

<pallas_src>
import numpy as np
import jax
import jax.numpy as jnp
from jax.experimental import pallas as pl
from jax.experimental.pallas import tpu as pltpu  # noqa: F401  (imported per template; kernel needs no TPU-specific primitives)

# ---------------- configuration (small, consistent with the module) ----------------
VOCAB_SIZE   = 50
EMBED_DIM    = 32
SEQ_LEN      = 16
BATCH        = 2
NUM_KERNEL   = 8            # config.num_kernel (conv output channels)
NUM_CLASS    = 4
KERNEL_SIZES = (2, 3, 4)    # 3 kernel sizes -> fc in_features = num_kernel * 3

K_MAX     = max(KERNEL_SIZES)                      # 4 taps in the packed conv weight
NUM_FEAT  = NUM_KERNEL * len(KERNEL_SIZES)         # 24
ROWS      = BATCH * SEQ_LEN                        # 32 b-major rows: r = b*SEQ_LEN + s
VOCAB_PAD = 128                                    # lane-dense / MXU-K-dense vocab padding
F_PAD     = 128                                    # lane-dense conv-feature / logits padding

# row offsets inside the packed f32 "misc" slab (all 8-sublane aligned)
R_BCONV   = 0                                      # row 0              : packed conv bias
R_MASK    = 8                                      # rows 8 .. 39       : (ROWS, F_PAD) validity mask
R_WFC     = R_MASK + ROWS                          # rows 40 .. 167     : (F_PAD, F_PAD) fc weight (zero-padded)
R_BFC     = R_WFC + F_PAD                          # row 168            : fc bias
MISC_ROWS = R_BFC + 8                              # 176

assert SEQ_LEN >= K_MAX
assert VOCAB_SIZE <= VOCAB_PAD and (VOCAB_PAD & (VOCAB_PAD - 1)) == 0
assert NUM_FEAT <= F_PAD and NUM_CLASS <= F_PAD


def textcnn_kernel(ids_ref, convw_ref, misc_ref, out_ref):
    """Whole forward pass, single shot (no grid).

    ids_ref   : (ROWS, K_MAX*VOCAB_PAD) int32  lane-block j of row r holds the token id at
                sequence position s+j for row r = b*SEQ_LEN + s (wrapped rows are masked)
    convw_ref : (K_MAX*VOCAB_PAD, F_PAD) bf16  embedding table folded into packed conv weights
    misc_ref  : (MISC_ROWS, F_PAD)       f32   [conv bias | validity mask | fc weight | fc bias]
    out_ref   : (BATCH, F_PAD)           f32   logits live in the first NUM_CLASS lanes
    """
    # one-hot over each 128-lane vocab block: exact in bf16, feeds the MXU directly
    lane_v = jax.lax.broadcasted_iota(jnp.int32, (ROWS, K_MAX * VOCAB_PAD), 1) & (VOCAB_PAD - 1)
    onehot = (ids_ref[...] == lane_v).astype(jnp.bfloat16)

    # embedding gather + all three convs as ONE bf16 matmul (M=32, K=512, N=128)
    conv = jnp.dot(onehot, convw_ref[...], preferred_element_type=jnp.float32)
    conv = jnp.maximum(conv + misc_ref[R_BCONV:R_BCONV + 1, :], 0.0)

    # zero windows that run past the end of each sequence (compile-time constant mask).
    # NOTE: zeroing (instead of -inf) is only safe because values are post-ReLU (>= 0),
    # so a zeroed window can never win the max; if the activation/pooling ever changes,
    # this must become a -inf mask before the max.
    conv = conv * misc_ref[R_MASK:R_MASK + ROWS, :]

    # max-pool over time per batch element (aligned static sublane slices)
    pooled = jnp.concatenate(
        [jnp.max(conv[b * SEQ_LEN:(b + 1) * SEQ_LEN, :], axis=0, keepdims=True)
         for b in range(BATCH)], axis=0)                          # (BATCH, F_PAD)

    # fc (dropout = eval-mode identity); single lane-dense (BATCH, 128) store
    out_ref[...] = (jnp.dot(pooled, misc_ref[R_WFC:R_WFC + F_PAD, :],
                            preferred_element_type=jnp.float32)
                    + misc_ref[R_BFC:R_BFC + 1, :])


def pack_params(params):
    """One-time packing of module parameters into the kernel's two fused operands.

    Runs at init only (hoisted off the per-call path, per the performance review).
    """
    hi = jax.lax.Precision.HIGHEST

    table = jnp.zeros((VOCAB_PAD, EMBED_DIM), jnp.float32)
    table = table.at[:VOCAB_SIZE].set(params["embedding"].astype(jnp.float32))

    # Fold the embedding table into the conv weights: block j holds M_j = table @ W_tap_j,
    # where W_tap_j[:, g*C:(g+1)*C] is conv-group g's tap-j weight (zero for taps >= k_g).
    blocks = []
    for j in range(K_MAX):
        wj = jnp.zeros((EMBED_DIM, NUM_FEAT), jnp.float32)
        for g, k in enumerate(KERNEL_SIZES):
            if j < k:
                w_tap = params[f"conv{g}_w"][:, 0, j, :].astype(jnp.float32)     # (C, E)
                wj = wj.at[:, g * NUM_KERNEL:(g + 1) * NUM_KERNEL].set(w_tap.T)
        mj = jnp.dot(table, wj, precision=hi)                                    # (VOCAB_PAD, NUM_FEAT)
        blocks.append(jnp.zeros((VOCAB_PAD, F_PAD), jnp.float32).at[:, :NUM_FEAT].set(mj))
    convw = jnp.concatenate(blocks, axis=0).astype(jnp.bfloat16)   # (K_MAX*VOCAB_PAD, F_PAD)

    misc = jnp.zeros((MISC_ROWS, F_PAD), jnp.float32)
    bconv = jnp.concatenate([params[f"conv{g}_b"].astype(jnp.float32)
                             for g in range(len(KERNEL_SIZES))])
    misc = misc.at[R_BCONV, :NUM_FEAT].set(bconv)

    # compile-time constant validity mask: row r (= b*SEQ_LEN + s), feature lane of group g
    # is a valid window start iff s <= SEQ_LEN - k_g; padded lanes stay zero.
    mask = np.zeros((ROWS, F_PAD), np.float32)
    s = np.arange(ROWS) % SEQ_LEN
    for g, k in enumerate(KERNEL_SIZES):
        mask[:, g * NUM_KERNEL:(g + 1) * NUM_KERNEL] = (s <= SEQ_LEN - k)[:, None]
    misc = misc.at[R_MASK:R_MASK + ROWS, :].set(jnp.asarray(mask))

    misc = misc.at[R_WFC:R_WFC + NUM_FEAT, :NUM_CLASS].set(params["fc_w"].T.astype(jnp.float32))
    misc = misc.at[R_BFC, :NUM_CLASS].set(params["fc_b"].astype(jnp.float32))
    return convw, misc


@jax.jit
def textcnn_forward(token_ids, convw, misc):
    """token_ids: (SEQ_LEN, BATCH) int32.  convw/misc: from pack_params (packed once).

    Returns (BATCH, NUM_CLASS) f32 logits.
    """
    # Per-call prep is only this tiny id shuffle (data dependent, cannot be hoisted):
    # b-major rows r = b*SEQ_LEN + s; lane-block j repeats the token id at position s+j.
    # Wrapped rows produce garbage windows that the in-kernel mask zeroes out.
    ids_bm = jnp.transpose(token_ids).reshape(ROWS)                              # (ROWS,)
    ids_mat = jnp.stack([jnp.roll(ids_bm, -j) for j in range(K_MAX)], axis=1)    # (ROWS, K_MAX)
    ids_rep = jnp.broadcast_to(ids_mat[:, :, None], (ROWS, K_MAX, VOCAB_PAD))
    ids_rep = ids_rep.reshape(ROWS, K_MAX * VOCAB_PAD).astype(jnp.int32)

    out = pl.pallas_call(
        textcnn_kernel,
        out_shape=jax.ShapeDtypeStruct((BATCH, F_PAD), jnp.float32),
        # no grid: single-shot kernel, whole arrays auto-copied to VMEM (< 0.3 MiB total)
    )(ids_rep, convw, misc)
    return out[:, :NUM_CLASS]


def make_params(key):
    ks = jax.random.split(key, 3 + 2 * len(KERNEL_SIZES))
    params = {
        "embedding": 0.1 * jax.random.normal(ks[0], (VOCAB_SIZE, EMBED_DIM), jnp.float32),
        "fc_w": 0.1 * jax.random.normal(ks[1], (NUM_CLASS, NUM_FEAT), jnp.float32),
        "fc_b": 0.1 * jax.random.normal(ks[2], (NUM_CLASS,), jnp.float32),
    }
    for i, k in enumerate(KERNEL_SIZES):
        params[f"conv{i}_w"] = 0.1 * jax.random.normal(
            ks[3 + 2 * i], (NUM_KERNEL, 1, k, EMBED_DIM), jnp.float32)
        params[f"conv{i}_b"] = 0.1 * jax.random.normal(
            ks[4 + 2 * i], (NUM_KERNEL,), jnp.float32)
    return params


def textcnn_reference(token_ids, params):
    """Pure-JAX reference mirroring the PyTorch forward (eval mode)."""
    hi = jax.lax.Precision.HIGHEST
    emb = params["embedding"][token_ids]                  # (S, B, E)
    emb = jnp.transpose(emb, (1, 0, 2))                   # (B, S, E)
    feats = []
    for i, k in enumerate(KERNEL_SIZES):
        w = params[f"conv{i}_w"][:, 0, :, :]              # (C, k, E)
        b = params[f"conv{i}_b"]                          # (C,)
        L = SEQ_LEN - k + 1
        windows = jnp.stack([emb[:, t:t + k, :] for t in range(L)], axis=1)  # (B, L, k, E)
        conv = jnp.einsum("blke,cke->blc", windows, w, precision=hi) + b     # (B, L, C)
        conv = jnp.maximum(conv, 0.0)
        feats.append(jnp.max(conv, axis=1))                                  # (B, C)
    feat = jnp.concatenate(feats, axis=1)                                    # (B, 3C)
    return jnp.dot(feat, params["fc_w"].T, precision=hi) + params["fc_b"]


if __name__ == "__main__":
    key = jax.random.PRNGKey(0)
    k_tok, k_par = jax.random.split(key)
    token_ids = jax.random.randint(k_tok, (SEQ_LEN, BATCH), 0, VOCAB_SIZE, dtype=jnp.int32)
    params = make_params(k_par)

    # parameter packing happens exactly once, outside the forward path
    convw, misc = pack_params(params)
    convw, misc = jax.block_until_ready(convw), jax.block_until_ready(misc)

    logits = textcnn_forward(token_ids, convw, misc)
    logits = jax.block_until_ready(logits)

    ref = textcnn_reference(token_ids, params)
    assert logits.shape == (BATCH, NUM_CLASS)
    assert jnp.allclose(logits, ref, atol=1e-3, rtol=1e-3), (logits, ref)

    print("KERNEL_OK")
</pallas_src>

<mosaic_0001>
module attributes {stable_mosaic.version = 11 : i64} {
  func.func @textcnn_kernel(%arg0: memref<32x512xi32, #tpu.memory_space<vmem>>, %arg1: memref<512x128xbf16, #tpu.memory_space<vmem>>, %arg2: memref<176x128xf32, #tpu.memory_space<vmem>>, %arg3: memref<2x128xf32, #tpu.memory_space<vmem>>) attributes {dimension_semantics = [], scalar_prefetch = 0 : i64, scratch_operands = 0 : i64, tpu.core_type = #tpu.core_type<tc>} {
    %0 = tpu.iota {dimensions = array<i32: 1>} : vector<32x512xi32>
    %c127_i32 = arith.constant 127 : i32
    %1 = vector.broadcast %c127_i32 : i32 to vector<32x512xi32>
    %2 = arith.andi %0, %1 : vector<32x512xi32>
    %c0 = arith.constant 0 : index
    %c0_0 = arith.constant 0 : index
    %3 = vector.load %arg0[%c0, %c0_0] : memref<32x512xi32, #tpu.memory_space<vmem>>, vector<32x512xi32>
    %4 = arith.cmpi eq, %3, %2 : vector<32x512xi32>
    %5 = arith.extui %4 : vector<32x512xi1> to vector<32x512xi32>
    %6 = arith.sitofp %5 : vector<32x512xi32> to vector<32x512xf32>
    %7 = arith.truncf %6 : vector<32x512xf32> to vector<32x512xbf16>
    %c0_1 = arith.constant 0 : index
    %c0_2 = arith.constant 0 : index
    %8 = vector.load %arg1[%c0_1, %c0_2] : memref<512x128xbf16, #tpu.memory_space<vmem>>, vector<512x128xbf16>
    %cst = arith.constant dense<0.000000e+00> : vector<32x128xf32>
    %9 = tpu.matmul %7, %8, %cst {dimension_numbers = #tpu.dot_dimension_numbers<[1], [0], [0], [1], [0, 0, 1, 1], [], []>} : vector<32x512xbf16>, vector<512x128xbf16>, vector<32x128xf32> -> vector<32x128xf32>
    %c0_3 = arith.constant 0 : index
    %c0_4 = arith.constant 0 : index
    %10 = vector.load %arg2[%c0_3, %c0_4] : memref<176x128xf32, #tpu.memory_space<vmem>>, vector<1x128xf32>
    %11 = vector.broadcast %10 : vector<1x128xf32> to vector<32x128xf32>
    %12 = arith.addf %9, %11 : vector<32x128xf32>
    %cst_5 = arith.constant 0.000000e+00 : f32
    %13 = vector.broadcast %cst_5 : f32 to vector<32x128xf32>
    %14 = arith.maximumf %12, %13 : vector<32x128xf32>
    %c8 = arith.constant 8 : index
    %c0_6 = arith.constant 0 : index
    %15 = vector.load %arg2[%c8, %c0_6] : memref<176x128xf32, #tpu.memory_space<vmem>>, vector<32x128xf32>
    %16 = arith.mulf %14, %15 : vector<32x128xf32>
    %17 = vector.extract_strided_slice %16 {offsets = [0, 0], sizes = [16, 128], strides = [1, 1]} : vector<32x128xf32> to vector<16x128xf32>
    %cst_7 = arith.constant dense<0xFF800000> : vector<128xf32>
    %18 = vector.multi_reduction <maximumf>, %17, %cst_7 [0] : vector<16x128xf32> to vector<128xf32>
    %19 = vector.shape_cast %18 : vector<128xf32> to vector<1x128xf32>
    %20 = vector.extract_strided_slice %16 {offsets = [16, 0], sizes = [16, 128], strides = [1, 1]} : vector<32x128xf32> to vector<16x128xf32>
    %cst_8 = arith.constant dense<0xFF800000> : vector<128xf32>
    %21 = vector.multi_reduction <maximumf>, %20, %cst_8 [0] : vector<16x128xf32> to vector<128xf32>
    %22 = vector.shape_cast %21 : vector<128xf32> to vector<1x128xf32>
    %23 = tpu.concatenate %19, %22 in 0 : vector<1x128xf32>, vector<1x128xf32> -> vector<2x128xf32>
    %c40 = arith.constant 40 : index
    %c0_9 = arith.constant 0 : index
    %24 = vector.load %arg2[%c40, %c0_9] : memref<176x128xf32, #tpu.memory_space<vmem>>, vector<128x128xf32>
    %cst_10 = arith.constant dense<0.000000e+00> : vector<2x128xf32>
    %25 = tpu.matmul %23, %24, %cst_10 {dimension_numbers = #tpu.dot_dimension_numbers<[1], [0], [0], [1], [0, 0, 1, 1], [], []>} : vector<2x128xf32>, vector<128x128xf32>, vector<2x128xf32> -> vector<2x128xf32>
    %c168 = arith.constant 168 : index
    %c0_11 = arith.constant 0 : index
    %26 = vector.load %arg2[%c168, %c0_11] : memref<176x128xf32, #tpu.memory_space<vmem>>, vector<1x128xf32>
    %27 = vector.broadcast %26 : vector<1x128xf32> to vector<2x128xf32>
    %28 = arith.addf %25, %27 : vector<2x128xf32>
    %c0_12 = arith.constant 0 : index
    %c0_13 = arith.constant 0 : index
    %29 = vector.load %arg3[%c0_12, %c0_13] : memref<2x128xf32, #tpu.memory_space<vmem>>, vector<2x128xf32>
    tpu.vector_store %arg3[%c0_12, %c0_13], %28 {strides = array<i32>} : memref<2x128xf32, #tpu.memory_space<vmem>>, vector<2x128xf32>,
    return
  }
}

</mosaic_0001>

<llo_original>
// kernel: textcnn_forward.1
$region0: #{textcnn_forward.1}
  #allocation0 [shape = 'u32[]', space=smem, size = 0x4, offset = 0x4, fixed_abs, tag = 'smem constant byte address 0x4 - core index']
  #allocation1 [shape = 'u32[144,128]{1,0:T(1,128)}', space=vmem, size = 0x12000, scoped, tag = 'internal scratch']
  %s0 = inlined_call_operand.vmem [shape: s32[32,512], index: 0, kind: input, shape index: {}]
  %s1 = inlined_call_operand.vmem [shape: bf16[512,128], index: 1, kind: input, shape index: {}]
  %s2 = inlined_call_operand.vmem [shape: f32[176,128], index: 2, kind: input, shape index: {}]
  %s3 = inlined_call_operand.hbm [shape: f32[2,128], index: 3, kind: output, shape index: {}]
  %s4 = sld [smem:[#allocation0]]
  $region22: #{textcnn_forward.1} parent=0
    _
  %s6 = ssub.s32 1, %s4
  %s7 = scalar_select 0, %s6, %s4
  $region1: #{textcnn_forward.1} parent=0
    #allocation2 [shape = 'u8[1024]{0}', space=vmem, size = 0x400, scoped, tag = 'output window, operand 0, single buffered']
    #allocation3 [shape = 's32[1]{0}', space=sflag, size = 0x4, scoped, tag = 'scoped memory for textcnn_forward.1']
    %8 = vsyncpa [#allocation3], 0
    // Predicated region
    $region2: #{textcnn_forward.1} parent=1 // pred_check
      _
    $region3: #{textcnn_forward.1} parent=1 // pred_check_branch
      %10 = sbr.rel (0) target = $region5
    $region4: #{textcnn_forward.1} parent=1 // pred_region
      _
    $region5: #{textcnn_forward.1} parent=1 // pred_fallthru
      _
    // Predicated region
    $region6: #{textcnn_forward.1} parent=1 // pred_check
      _
    $region7: #{textcnn_forward.1} parent=1 // pred_check_branch
      %12 = sbr.rel (0) target = $region9
    $region8: #{textcnn_forward.1} parent=1 // pred_region
      _
    $region9: #{textcnn_forward.1} parent=1 // pred_fallthru
      _
    // Predicated region
    $region10: #{textcnn_forward.1} parent=1 // pred_check
      _
    $region11: #{textcnn_forward.1} parent=1 // pred_check_branch
      %14 = sbr.rel (0) target = $region13
    $region12: #{textcnn_forward.1} parent=1 // pred_region
      _
    $region13: #{textcnn_forward.1} parent=1 // pred_fallthru
      _
    %v16 = vlaneseq
    %v17 = vand.u32 %v16, 127
    %v18 = vadd.s32 %v17, 128
    %v19 = vadd.s32 %v17, 256
    %v20 = vadd.s32 %v17, 384
    %v21 = vand.u32 %v17, 127
    %v22 = vand.u32 %v18, 127
    %v23 = vand.u32 %v19, 127
    %v24 = vand.u32 %v20, 127
    %v25 = vld [vmem:[%s0] sm:$0xff]
    %v26 = vld [vmem:[%s0 + $0x8] sm:$0xff]
    %v27 = vld [vmem:[%s0 + $0x10] sm:$0xff]
    %v28 = vld [vmem:[%s0 + $0x18] sm:$0xff]
    %v29 = vld [vmem:[%s0 + $0x20] sm:$0xff]
    %v30 = vld [vmem:[%s0 + $0x28] sm:$0xff]
    %v31 = vld [vmem:[%s0 + $0x30] sm:$0xff]
    %v32 = vld [vmem:[%s0 + $0x38] sm:$0xff]
    %v33 = vld [vmem:[%s0 + $0x40] sm:$0xff]
    %v34 = vld [vmem:[%s0 + $0x48] sm:$0xff]
    %v35 = vld [vmem:[%s0 + $0x50] sm:$0xff]
    %v36 = vld [vmem:[%s0 + $0x58] sm:$0xff]
    %v37 = vld [vmem:[%s0 + $0x60] sm:$0xff]
    %v38 = vld [vmem:[%s0 + $0x68] sm:$0xff]
    %v39 = vld [vmem:[%s0 + $0x70] sm:$0xff]
    %v40 = vld [vmem:[%s0 + $0x78] sm:$0xff]
    %vm41 = vcmp.eq.s32.totalorder %v25, %v21
    %vm42 = vcmp.eq.s32.totalorder %v26, %v22
    %vm43 = vcmp.eq.s32.totalorder %v27, %v23
    %vm44 = vcmp.eq.s32.totalorder %v28, %v24
    %vm45 = vcmp.eq.s32.totalorder %v29, %v21
    %vm46 = vcmp.eq.s32.totalorder %v30, %v22
    %vm47 = vcmp.eq.s32.totalorder %v31, %v23
    %vm48 = vcmp.eq.s32.totalorder %v32, %v24
    %vm49 = vcmp.eq.s32.totalorder %v33, %v21
    %vm50 = vcmp.eq.s32.totalorder %v34, %v22
    %vm51 = vcmp.eq.s32.totalorder %v35, %v23
    %vm52 = vcmp.eq.s32.totalorder %v36, %v24
    %vm53 = vcmp.eq.s32.totalorder %v37, %v21
    %vm54 = vcmp.eq.s32.totalorder %v38, %v22
    %vm55 = vcmp.eq.s32.totalorder %v39, %v23
    %vm56 = vcmp.eq.s32.totalorder %v40, %v24
    %v57 = vsel %vm41, 1, 0
    %v58 = vsel %vm42, 1, 0
    %v59 = vsel %vm43, 1, 0
    %v60 = vsel %vm44, 1, 0
    %v61 = vsel %vm45, 1, 0
    %v62 = vsel %vm46, 1, 0
    %v63 = vsel %vm47, 1, 0
    %v64 = vsel %vm48, 1, 0
    %v65 = vsel %vm49, 1, 0
    %v66 = vsel %vm50, 1, 0
    %v67 = vsel %vm51, 1, 0
    %v68 = vsel %vm52, 1, 0
    %v69 = vsel %vm53, 1, 0
    %v70 = vsel %vm54, 1, 0
    %v71 = vsel %vm55, 1, 0
    %v72 = vsel %vm56, 1, 0
    %v73 = vcvt.s32.f32 %v57
    %v74 = vcvt.s32.f32 %v58
    %v75 = vcvt.s32.f32 %v59
    %v76 = vcvt.s32.f32 %v60
    %v77 = vcvt.s32.f32 %v61
    %v78 = vcvt.s32.f32 %v62
    %v79 = vcvt.s32.f32 %v63
    %v80 = vcvt.s32.f32 %v64
    %v81 = vcvt.s32.f32 %v65
    %v82 = vcvt.s32.f32 %v66
    %v83 = vcvt.s32.f32 %v67
    %v84 = vcvt.s32.f32 %v68
    %v85 = vcvt.s32.f32 %v69
    %v86 = vcvt.s32.f32 %v70
    %v87 = vcvt.s32.f32 %v71
    %v88 = vcvt.s32.f32 %v72
    %v89 = vpack.c.bf16 %v77, %v73
    %v90 = vpack.c.bf16 %v78, %v74
    %v91 = vpack.c.bf16 %v79, %v75
    %v92 = vpack.c.bf16 %v80, %v76
    %v93 = vpack.c.bf16 %v85, %v81
    %v94 = vpack.c.bf16 %v86, %v82
    %v95 = vpack.c.bf16 %v87, %v83
    %v96 = vpack.c.bf16 %v88, %v84
    %v97 = vld [vmem:[%s1] sm:$0xf]
    %v98 = vld [vmem:[%s1 + $0x4] sm:$0xf]
    %v99 = vld [vmem:[%s1 + $0x8] sm:$0xf]
    %v100 = vld [vmem:[%s1 + $0xc] sm:$0xf]
    %v101 = vld [vmem:[%s1 + $0x10] sm:$0xf]
    %v102 = vld [vmem:[%s1 + $0x14] sm:$0xf]
    %v103 = vld [vmem:[%s1 + $0x18] sm:$0xf]
    %v104 = vld [vmem:[%s1 + $0x1c] sm:$0xf]
    %v105 = vld [vmem:[%s1 + $0x20] sm:$0xf]
    %v106 = vld [vmem:[%s1 + $0x24] sm:$0xf]
    %v107 = vld [vmem:[%s1 + $0x28] sm:$0xf]
    %v108 = vld [vmem:[%s1 + $0x2c] sm:$0xf]
    %v109 = vld [vmem:[%s1 + $0x30] sm:$0xf]
    %v110 = vld [vmem:[%s1 + $0x34] sm:$0xf]
    %v111 = vld [vmem:[%s1 + $0x38] sm:$0xf]
    %v112 = vld [vmem:[%s1 + $0x3c] sm:$0xf]
    %v113 = vld [vmem:[%s1 + $0x40] sm:$0xf]
    %v114 = vld [vmem:[%s1 + $0x44] sm:$0xf]
    %v115 = vld [vmem:[%s1 + $0x48] sm:$0xf]
    %v116 = vld [vmem:[%s1 + $0x4c] sm:$0xf]
    %v117 = vld [vmem:[%s1 + $0x50] sm:$0xf]
    %v118 = vld [vmem:[%s1 + $0x54] sm:$0xf]
    %v119 = vld [vmem:[%s1 + $0x58] sm:$0xf]
    %v120 = vld [vmem:[%s1 + $0x5c] sm:$0xf]
    %v121 = vld [vmem:[%s1 + $0x60] sm:$0xf]
    %v122 = vld [vmem:[%s1 + $0x64] sm:$0xf]
    %v123 = vld [vmem:[%s1 + $0x68] sm:$0xf]
    %v124 = vld [vmem:[%s1 + $0x6c] sm:$0xf]
    %v125 = vld [vmem:[%s1 + $0x70] sm:$0xf]
    %v126 = vld [vmem:[%s1 + $0x74] sm:$0xf]
    %v127 = vld [vmem:[%s1 + $0x78] sm:$0xf]
    %v128 = vld [vmem:[%s1 + $0x7c] sm:$0xf]
    %v129 = vld [vmem:[%s1 + $0x80] sm:$0xf]
    %v130 = vld [vmem:[%s1 + $0x84] sm:$0xf]
    %v131 = vld [vmem:[%s1 + $0x88] sm:$0xf]
    %v132 = vld [vmem:[%s1 + $0x8c] sm:$0xf]
    %v133 = vld [vmem:[%s1 + $0x90] sm:$0xf]
    %v134 = vld [vmem:[%s1 + $0x94] sm:$0xf]
    %v135 = vld [vmem:[%s1 + $0x98] sm:$0xf]
    %v136 = vld [vmem:[%s1 + $0x9c] sm:$0xf]
    %v137 = vld [vmem:[%s1 + $0xa0] sm:$0xf]
    %v138 = vld [vmem:[%s1 + $0xa4] sm:$0xf]
    %v139 = vld [vmem:[%s1 + $0xa8] sm:$0xf]
    %v140 = vld [vmem:[%s1 + $0xac] sm:$0xf]
    %v141 = vld [vmem:[%s1 + $0xb0] sm:$0xf]
    %v142 = vld [vmem:[%s1 + $0xb4] sm:$0xf]
    %v143 = vld [vmem:[%s1 + $0xb8] sm:$0xf]
    %v144 = vld [vmem:[%s1 + $0xbc] sm:$0xf]
    %v145 = vld [vmem:[%s1 + $0xc0] sm:$0xf]
    %v146 = vld [vmem:[%s1 + $0xc4] sm:$0xf]
    %v147 = vld [vmem:[%s1 + $0xc8] sm:$0xf]
    %v148 = vld [vmem:[%s1 + $0xcc] sm:$0xf]
    %v149 = vld [vmem:[%s1 + $0xd0] sm:$0xf]
    %v150 = vld [vmem:[%s1 + $0xd4] sm:$0xf]
    %v151 = vld [vmem:[%s1 + $0xd8] sm:$0xf]
    %v152 = vld [vmem:[%s1 + $0xdc] sm:$0xf]
    %v153 = vld [vmem:[%s1 + $0xe0] sm:$0xf]
    %v154 = vld [vmem:[%s1 + $0xe4] sm:$0xf]
    %v155 = vld [vmem:[%s1 + $0xe8] sm:$0xf]
    %v156 = vld [vmem:[%s1 + $0xec] sm:$0xf]
    %v157 = vld [vmem:[%s1 + $0xf0] sm:$0xf]
    %v158 = vld [vmem:[%s1 + $0xf4] sm:$0xf]
    %v159 = vld [vmem:[%s1 + $0xf8] sm:$0xf]
    %v160 = vld [vmem:[%s1 + $0xfc] sm:$0xf]
    %v161 = vld [vmem:[%s2] sm:$0x1]
    %v162 = vlaneseq
    %v163 = vshrl.u32 %v162, 7
    %v164 = vsub.s32 0, %v163
    %v165 = vrot.slane %v161, %v164
    %v230 = vunpack.c.l.b16 %v97
    %v231 = vunpack.c.l.b16 %v98
    %v232 = vunpack.c.l.b16 %v99
    %v233 = vunpack.c.l.b16 %v100
    %v234 = vunpack.c.l.b16 %v101
    %v235 = vunpack.c.l.b16 %v102
    %v236 = vunpack.c.l.b16 %v103
    %v237 = vunpack.c.l.b16 %v104
    %v238 = vunpack.c.l.b16 %v105
    %v239 = vunpack.c.l.b16 %v106
    %v240 = vunpack.c.l.b16 %v107
    %v241 = vunpack.c.l.b16 %v108
    %v242 = vunpack.c.l.b16 %v109
    %v243 = vunpack.c.l.b16 %v110
    %v244 = vunpack.c.l.b16 %v111
    %v245 = vunpack.c.l.b16 %v112
    %v246 = vunpack.c.l.b16 %v113
    %v247 = vunpack.c.l.b16 %v114
    %v248 = vunpack.c.l.b16 %v115
    %v249 = vunpack.c.l.b16 %v116
    %v250 = vunpack.c.l.b16 %v117
    %v251 = vunpack.c.l.b16 %v118
    %v252 = vunpack.c.l.b16 %v119
    %v253 = vunpack.c.l.b16 %v120
    %v254 = vunpack.c.l.b16 %v121
    %v255 = vunpack.c.l.b16 %v122
    %v256 = vunpack.c.l.b16 %v123
    %v257 = vunpack.c.l.b16 %v124
    %v258 = vunpack.c.l.b16 %v125
    %v259 = vunpack.c.l.b16 %v126
    %v260 = vunpack.c.l.b16 %v127
    %v261 = vunpack.c.l.b16 %v128
    %v262 = vunpack.c.l.b16 %v129
    %v263 = vunpack.c.l.b16 %v130
    %v264 = vunpack.c.l.b16 %v131
    %v265 = vunpack.c.l.b16 %v132
    %v266 = vunpack.c.l.b16 %v133
    %v267 = vunpack.c.l.b16 %v134
    %v268 = vunpack.c.l.b16 %v135
    %v269 = vunpack.c.l.b16 %v136
    %v270 = vunpack.c.l.b16 %v137
    %v271 = vunpack.c.l.b16 %v138
    %v272 = vunpack.c.l.b16 %v139
    %v273 = vunpack.c.l.b16 %v140
    %v274 = vunpack.c.l.b16 %v141
    %v275 = vunpack.c.l.b16 %v142
    %v276 = vunpack.c.l.b16 %v143
    %v277 = vunpack.c.l.b16 %v144
    %v278 = vunpack.c.l.b16 %v145
    %v279 = vunpack.c.l.b16 %v146
    %v280 = vunpack.c.l.b16 %v147
    %v281 = vunpack.c.l.b16 %v148
    %v282 = vunpack.c.l.b16 %v149
    %v283 = vunpack.c.l.b16 %v150
    %v284 = vunpack.c.l.b16 %v151
    %v285 = vunpack.c.l.b16 %v152
    %v286 = vunpack.c.l.b16 %v153
    %v287 = vunpack.c.l.b16 %v154
    %v288 = vunpack.c.l.b16 %v155
    %v289 = vunpack.c.l.b16 %v156
    %v290 = vunpack.c.l.b16 %v157
    %v291 = vunpack.c.l.b16 %v158
    %v292 = vunpack.c.l.b16 %v159
    %v293 = vunpack.c.l.b16 %v160
    %v294 = vpack.c.b16 %v231, %v230
    %v295 = vpack.c.b16 %v233, %v232
    %v296 = vpack.c.b16 %v235, %v234
    %v297 = vpack.c.b16 %v237, %v236
    %v298 = vpack.c.b16 %v239, %v238
    %v299 = vpack.c.b16 %v241, %v240
    %v300 = vpack.c.b16 %v243, %v242
    %v301 = vpack.c.b16 %v245, %v244
    %v302 = vpack.c.b16 %v247, %v246
    %v303 = vpack.c.b16 %v249, %v248
    %v304 = vpack.c.b16 %v251, %v250
    %v305 = vpack.c.b16 %v253, %v252
    %v306 = vpack.c.b16 %v255, %v254
    %v307 = vpack.c.b16 %v257, %v256
    %v308 = vpack.c.b16 %v259, %v258
    %v309 = vpack.c.b16 %v261, %v260
    %v310 = vpack.c.b16 %v263, %v262
    %v311 = vpack.c.b16 %v265, %v264
    %v312 = vpack.c.b16 %v267, %v266
    %v313 = vpack.c.b16 %v269, %v268
    %v314 = vpack.c.b16 %v271, %v270
    %v315 = vpack.c.b16 %v273, %v272
    %v316 = vpack.c.b16 %v275, %v274
    %v317 = vpack.c.b16 %v277, %v276
    %v318 = vpack.c.b16 %v279, %v278
    %v319 = vpack.c.b16 %v281, %v280
    %v320 = vpack.c.b16 %v283, %v282
    %v321 = vpack.c.b16 %v285, %v284
    %v322 = vpack.c.b16 %v287, %v286
    %v323 = vpack.c.b16 %v289, %v288
    %v324 = vpack.c.b16 %v291, %v290
    %v325 = vpack.c.b16 %v293, %v292
    %358 = vmatprep.subr.bf16.mxu0 0
    %359 = vmatpush1.bf16.msra.mxu0 %v294
    %360 = vmatprep.subr.bf16.mxu0 0
    %361 = vmatpush1.bf16.msra.mxu0 %v295
    %362 = vmatprep.subr.bf16.mxu0 0
    %363 = vmatpush1.bf16.msra.mxu0 %v296
    %364 = vmatprep.subr.bf16.mxu0 0
    %365 = vmatpush1.bf16.msra.mxu0 %v297
    %366 = vmatprep.subr.bf16.mxu0 0
    %367 = vmatpush1.bf16.msra.mxu0 %v298
    %368 = vmatprep.subr.bf16.mxu0 0
    %369 = vmatpush1.bf16.msra.mxu0 %v299
    %370 = vmatprep.subr.bf16.mxu0 0
    %371 = vmatpush1.bf16.msra.mxu0 %v300
    %372 = vmatprep.subr.bf16.mxu0 0
    %373 = vmatpush1.bf16.msra.mxu0 %v301
    %374 = vmatprep.subr.bf16.mxu0 0
    %375 = vmatpush1.bf16.msra.mxu0 %v302
    %376 = vmatprep.subr.bf16.mxu0 0
    %377 = vmatpush1.bf16.msra.mxu0 %v303
    %378 = vmatprep.subr.bf16.mxu0 0
    %379 = vmatpush1.bf16.msra.mxu0 %v304
    %380 = vmatprep.subr.bf16.mxu0 0
    %381 = vmatpush1.bf16.msra.mxu0 %v305
    %382 = vmatprep.subr.bf16.mxu0 0
    %383 = vmatpush1.bf16.msra.mxu0 %v306
    %384 = vmatprep.subr.bf16.mxu0 0
    %385 = vmatpush1.bf16.msra.mxu0 %v307
    %386 = vmatprep.subr.bf16.mxu0 0
    %387 = vmatpush1.bf16.msra.mxu0 %v308
    %388 = vmatprep.subr.bf16.mxu0 0
    %389 = vmatpush1.bf16.msra.mxu0 %v309
    %390 = vmatprep.mubr.bf16.mxu0 %v90
    %391 = vmatmul.mubr.bf16.gmra.mrb[0].mxu0 %v89
    %v392 = vpop.f32.mrb[0].mxu0
    %v393 = vadd.f32 %v165, %v392
    %v394 = vpop.f32.mrb[0].mxu0
    %v395 = vpop.f32.mrb[0].mxu0
    %v396 = vadd.f32 %v165, %v395
    %v397 = vpop.f32.mrb[0].mxu0
    %398 = vmatprep.mubr.bf16.mxu0 %v94
    %399 = vmatmul.mubr.bf16.gmra.mrb[0].mxu0 %v93
    %v400 = vpop.f32.mrb[0].mxu0
    %v401 = vadd.f32 %v165, %v400
    %v402 = vpop.f32.mrb[0].mxu0
    %v403 = vpop.f32.mrb[0].mxu0
    %v404 = vadd.f32 %v165, %v403
    %v405 = vpop.f32.mrb[0].mxu0
    %406 = vdwg.mxu0
    %407 = vmatprep.subr.bf16.mxu0 0
    %408 = vmatpush1.bf16.msra.mxu0 %v310
    %409 = vmatprep.subr.bf16.mxu0 0
    %410 = vmatpush1.bf16.msra.mxu0 %v311
    %411 = vmatprep.subr.bf16.mxu0 0
    %412 = vmatpush1.bf16.msra.mxu0 %v312
    %413 = vmatprep.subr.bf16.mxu0 0
    %414 = vmatpush1.bf16.msra.mxu0 %v313
    %415 = vmatprep.subr.bf16.mxu0 0
    %416 = vmatpush1.bf16.msra.mxu0 %v314
    %417 = vmatprep.subr.bf16.mxu0 0
    %418 = vmatpush1.bf16.msra.mxu0 %v315
    %419 = vmatprep.subr.bf16.mxu0 0
    %420 = vmatpush1.bf16.msra.mxu0 %v316
    %421 = vmatprep.subr.bf16.mxu0 0
    %422 = vmatpush1.bf16.msra.mxu0 %v317
    %423 = vmatprep.subr.bf16.mxu0 0
    %424 = vmatpush1.bf16.msra.mxu0 %v318
    %425 = vmatprep.subr.bf16.mxu0 0
    %426 = vmatpush1.bf16.msra.mxu0 %v319
    %427 = vmatprep.subr.bf16.mxu0 0
    %428 = vmatpush1.bf16.msra.mxu0 %v320
    %429 = vmatprep.subr.bf16.mxu0 0
    %430 = vmatpush1.bf16.msra.mxu0 %v321
    %431 = vmatprep.subr.bf16.mxu0 0
    %432 = vmatpush1.bf16.msra.mxu0 %v322
    %433 = vmatprep.subr.bf16.mxu0 0
    %434 = vmatpush1.bf16.msra.mxu0 %v323
    %435 = vmatprep.subr.bf16.mxu0 0
    %436 = vmatpush1.bf16.msra.mxu0 %v324
    %437 = vmatprep.subr.bf16.mxu0 0
    %438 = vmatpush1.bf16.msra.mxu0 %v325
    %439 = vmatprep.mubr.bf16.mxu0 %v92
    %440 = vmatmul.mubr.bf16.gmra.mrb[0].mxu0 %v91
    %v441 = vpop.f32.mrb[0].mxu0
    %v442 = vadd.f32 %v393, %v441
    %v443 = vpop.f32.mrb[0].mxu0
    %v444 = vpop.f32.mrb[0].mxu0
    %v445 = vadd.f32 %v396, %v444
    %v446 = vpop.f32.mrb[0].mxu0
    %447 = vmatprep.mubr.bf16.mxu0 %v96
    %448 = vmatmul.mubr.bf16.gmra.mrb[0].mxu0 %v95
    %v449 = vpop.f32.mrb[0].mxu0
    %v450 = vadd.f32 %v401, %v449
    %v451 = vpop.f32.mrb[0].mxu0
    %v452 = vpop.f32.mrb[0].mxu0
    %v453 = vadd.f32 %v404, %v452
    %v454 = vpop.f32.mrb[0].mxu0
    %455 = vdwg.mxu0
    %v456 = vmax.f32 %v442, 0.0
    %v457 = vmax.f32 %v445, 0.0
    %v458 = vmax.f32 %v450, 0.0
    %v459 = vmax.f32 %v453, 0.0
    %v460 = vld [vmem:[%s2 + $0x8] sm:$0xff]
    %v461 = vld [vmem:[%s2 + $0x10] sm:$0xff]
    %v462 = vld [vmem:[%s2 + $0x18] sm:$0xff]
    %v463 = vld [vmem:[%s2 + $0x20] sm:$0xff]
    %v464 = vmul.f32 %v456, %v460
    %v465 = vmul.f32 %v457, %v461
    %v466 = vmul.f32 %v458, %v462
    %v467 = vmul.f32 %v459, %v463
    %v468 = vmax.f32 %v464, %v465
    %v469 = vrot.slane %v468, 4
    %v470 = vmax.f32 %v468, %v469
    %v471 = vrot.slane %v470, 2
    %v472 = vmax.f32 %v470, %v471
    %v473 = vrot.slane %v472, 1
    %v474 = vmax.f32 %v472, %v473
    %v475 = vmax.f32 %v466, %v467
    %v476 = vrot.slane %v475, 4
    %v477 = vmax.f32 %v475, %v476
    %v478 = vrot.slane %v477, 2
    %v479 = vmax.f32 %v477, %v478
    %v480 = vrot.slane %v479, 1
    %v481 = vmax.f32 %v479, %v480
    %vm482 = vcmask 1040384
    %v483 = vsel %vm482, %v474, %v481
    %v484 = vld [vmem:[%s2 + $0x28] sm:$0xff]
    %v485 = vld [vmem:[%s2 + $0x30] sm:$0xff]
    %v486 = vld [vmem:[%s2 + $0x38] sm:$0xff]
    %v487 = vld [vmem:[%s2 + $0x40] sm:$0xff]
    %v488 = vld [vmem:[%s2 + $0x48] sm:$0xff]
    %v489 = vld [vmem:[%s2 + $0x50] sm:$0xff]
    %v490 = vld [vmem:[%s2 + $0x58] sm:$0xff]
    %v491 = vld [vmem:[%s2 + $0x60] sm:$0xff]
    %v492 = vld [vmem:[%s2 + $0x68] sm:$0xff]
    %v493 = vld [vmem:[%s2 + $0x70] sm:$0xff]
    %v494 = vld [vmem:[%s2 + $0x78] sm:$0xff]
    %v495 = vld [vmem:[%s2 + $0x80] sm:$0xff]
    %v496 = vld [vmem:[%s2 + $0x88] sm:$0xff]
    %v497 = vld [vmem:[%s2 + $0x90] sm:$0xff]
    %v498 = vld [vmem:[%s2 + $0x98] sm:$0xff]
    %v499 = vld [vmem:[%s2 + $0xa0] sm:$0xff]
    %v500 = vld [vmem:[%s2 + $0xa8] sm:$0x1]
    %v501 = vlaneseq
    %v502 = vshrl.u32 %v501, 7
    %v503 = vsub.s32 0, %v502
    %v504 = vrot.slane %v500, %v503
    %505 = vmatprep.subr.mxu0 0.0
    %506 = vmatpush1.msra.mxu0 %v484
    %507 = vmatprep.subr.mxu0 0.0
    %508 = vmatpush1.msra.mxu0 %v485
    %509 = vmatprep.subr.mxu0 0.0
    %510 = vmatpush1.msra.mxu0 %v486
    %511 = vmatprep.subr.mxu0 0.0
    %512 = vmatpush1.msra.mxu0 %v487
    %513 = vmatprep.subr.mxu0 0.0
    %514 = vmatpush1.msra.mxu0 %v488
    %515 = vmatprep.subr.mxu0 0.0
    %516 = vmatpush1.msra.mxu0 %v489
    %517 = vmatprep.subr.mxu0 0.0
    %518 = vmatpush1.msra.mxu0 %v490
    %519 = vmatprep.subr.mxu0 0.0
    %520 = vmatpush1.msra.mxu0 %v491
    %521 = vmatprep.subr.mxu0 0.0
    %522 = vmatpush1.msra.mxu0 %v492
    %523 = vmatprep.subr.mxu0 0.0
    %524 = vmatpush1.msra.mxu0 %v493
    %525 = vmatprep.subr.mxu0 0.0
    %526 = vmatpush1.msra.mxu0 %v494
    %527 = vmatprep.subr.mxu0 0.0
    %528 = vmatpush1.msra.mxu0 %v495
    %529 = vmatprep.subr.mxu0 0.0
    %530 = vmatpush1.msra.mxu0 %v496
    %531 = vmatprep.subr.mxu0 0.0
    %532 = vmatpush1.msra.mxu0 %v497
    %533 = vmatprep.subr.mxu0 0.0
    %534 = vmatpush1.msra.mxu0 %v498
    %535 = vmatprep.subr.mxu0 0.0
    %536 = vmatpush1.msra.mxu0 %v499
    %537 = vmatprep.subr.mxu0 0.0
    %538 = vmatpush1.msra.mxu0 0.0
    %539 = vmatprep.subr.mxu0 0.0
    %540 = vmatpush1.msra.mxu0 0.0
    %541 = vmatprep.subr.mxu0 0.0
    %542 = vmatpush1.msra.mxu0 0.0
    %543 = vmatprep.subr.mxu0 0.0
    %544 = vmatpush1.msra.mxu0 0.0
    %545 = vmatprep.subr.mxu0 0.0
    %546 = vmatpush1.msra.mxu0 0.0
    %547 = vmatprep.subr.mxu0 0.0
    %548 = vmatpush1.msra.mxu0 0.0
    %549 = vmatprep.subr.mxu0 0.0
    %550 = vmatpush1.msra.mxu0 0.0
    %551 = vmatprep.subr.mxu0 0.0
    %552 = vmatpush1.msra.mxu0 0.0
    %553 = vmatprep.subr.mxu0 0.0
    %554 = vmatpush1.msra.mxu0 0.0
    %555 = vmatprep.subr.mxu0 0.0
    %556 = vmatpush1.msra.mxu0 0.0
    %557 = vmatprep.subr.mxu0 0.0
    %558 = vmatpush1.msra.mxu0 0.0
    %559 = vmatprep.subr.mxu0 0.0
    %560 = vmatpush1.msra.mxu0 0.0
    %561 = vmatprep.subr.mxu0 0.0
    %562 = vmatpush1.msra.mxu0 0.0
    %563 = vmatprep.subr.mxu0 0.0
    %564 = vmatpush1.msra.mxu0 0.0
    %565 = vmatprep.subr.mxu0 0.0
    %566 = vmatpush1.msra.mxu0 0.0
    %567 = vmatprep.subr.mxu0 0.0
    %568 = vmatpush1.msra.mxu0 0.0
    %569 = vmatprep.mubr.f32.mxu0 0.0
    %570 = vmatmul.mubr.f32.gmra.mrb[0].mxu0 %v483
    %v571 = vpop.f32.mrb[0].mxu0
    %v572 = vadd.f32 %v504, %v571
    %v573 = vpop.f32.mrb[0].mxu0
    %574 = vdwg.mxu0
    %575 = vst [vmem:[#allocation2] sm:$0x3] %v572
    // Predicated region
    $region14: #{textcnn_forward.1} parent=1 // pred_check
      _
    $region15: #{textcnn_forward.1} parent=1 // pred_check_branch
      %577 = sbr.rel (0) target = $region17
    $region16: #{textcnn_forward.1} parent=1 // pred_region
      %s579 = ssub.s32 32, 32
      %580 = vsyncadd [#allocation3], %s579
      %s582 = sshll.u32 [#allocation2], 4
      %s583 = int_to_ptr.vmem [resolvable:$true] %s582
      %585 = dma.vmem_to_hbm [thread:$0]  %s583, 32, %s3, [#allocation3]
    $region17: #{textcnn_forward.1} parent=1 // pred_fallthru
      _
    // Predicated region
    $region18: #{textcnn_forward.1} parent=1 // pred_check
      _
    $region19: #{textcnn_forward.1} parent=1 // pred_check_branch
      %587 = sbr.rel (0) target = $region21
    $region20: #{textcnn_forward.1} parent=1 // pred_region
      %588 = dma.done [#allocation3], 32
    $region21: #{textcnn_forward.1} parent=1 // pred_fallthru
      _
    %589 = vsyncpa [#allocation3], 1

</llo_original>
